<compile_context>
chip_gen: v7x
topology: tpu7x:2x2x1
jax: 0.10.0
libtpu: 0.0.40
codegen_flags: <defaults>
</compile_context>

<pallas_src>
from functools import partial

import numpy as np
import jax
import jax.numpy as jnp
from jax.experimental import pallas as pl
from jax.experimental.pallas import tpu as pltpu


_LANE = 128      # lane width: head output padded to this for unmasked stores
_SUBLANE = 8     # f32 sublane rows: batch tile rounded up to a multiple of this


# ------------------------------ fused kernel -------------------------------

def _fused_kernel(k_ref, lam_ref, x0_ref, x1_ref, w1_ref, w2_ref, w3_ref,
                  b_ref, o_ref, xs_ref, hs_ref):
    """Whole backbone + mixup in one kernel.

    k == -1 : input mixup on (x0, x1) before block 1
    k ==  0 : blend block-1 outputs of the x0-path and x1-path
    k ==  1 : blend block-2 outputs
    Blend factors collapse to the exact-identity case at unselected layers, so
    a single compiled kernel serves every branch with (k, lam) passed as data.
    """
    k = k_ref[0]
    lam = lam_ref[0]
    tm = x0_ref.shape[0]          # batch tile rows (static)
    hid = w1_ref.shape[1]         # hidden width (static)

    m_in = jnp.where(k == -1, lam, 1.0)
    m0 = jnp.where(k == 0, lam, 1.0)
    m1 = jnp.where(k == 1, lam, 1.0)

    x0 = x0_ref[...]
    x1 = x1_ref[...]

    # Row-stack the mixed path (rows [0, tm)) and the "other" path
    # (rows [tm, 2tm)) so each Linear is ONE MXU dot: the (D, H)/(H, H) RHS is
    # pushed through the MXU once per block instead of twice.
    xs_ref[0:tm, :] = x1 + m_in * (x0 - x1)        # input mixup (k == -1)
    xs_ref[tm:2 * tm, :] = x1

    # coalesced, lane-padded biases: row 0 = b1, row 1 = b2, row 2 = b3
    b1 = b_ref[0:1, 0:hid]
    b2 = b_ref[1:2, 0:hid]
    b3 = b_ref[2:3, :]

    # block 1 (MixupModule): Linear + ReLU, both paths in one dot
    h1 = jnp.maximum(
        jnp.dot(xs_ref[...], w1_ref[...], preferred_element_type=jnp.float32) + b1,
        0.0)
    h1m = h1[0:tm, :]
    h1o = h1[tm:2 * tm, :]

    # hook_modify at layer 0 (k == 0); the "other" path stays unblended
    hs_ref[0:tm, :] = h1o + m0 * (h1m - h1o)
    hs_ref[tm:2 * tm, :] = h1o

    # block 2 (MixupModule): Linear + ReLU, both paths in one dot
    h2 = jnp.maximum(
        jnp.dot(hs_ref[...], w2_ref[...], preferred_element_type=jnp.float32) + b2,
        0.0)
    h2m = h2[0:tm, :]
    h2o = h2[tm:2 * tm, :]

    # hook_modify at layer 1 (k == 1)
    h2m = h2o + m1 * (h2m - h2o)

    # head (weights lane-padded to 128 output columns -> unmasked (tm,128) vst)
    out = jnp.dot(h2m, w3_ref[...], preferred_element_type=jnp.float32) + b3
    o_ref[...] = out.astype(o_ref.dtype)


@partial(jax.jit, static_argnames=("num_classes",))
def _device_forward(k_arr, lam_arr, x0, x1, prep, *, num_classes):
    """Single jitted device graph: flatten -> fused Pallas kernel -> lane slice."""
    N = x0.shape[0]
    D = int(np.prod(x0.shape[1:]))
    f0 = x0.reshape(N, D).astype(jnp.float32)
    f1 = x1.reshape(N, D).astype(jnp.float32)

    hidden = prep["w1"].shape[1]

    # batch tile: up to 128 rows per grid step, sublane aligned.  Ragged edge
    # blocks are handled by the BlockSpec machinery (padded rows are
    # row-independent and never written back), so no per-call input pads.
    TM = min(128, pl.cdiv(N, _SUBLANE) * _SUBLANE)
    grid = (pl.cdiv(N, TM),)

    out_p = pl.pallas_call(
        _fused_kernel,
        out_shape=jax.ShapeDtypeStruct((N, _LANE), jnp.float32),
        grid=grid,
        in_specs=[
            pl.BlockSpec(memory_space=pltpu.SMEM),              # k
            pl.BlockSpec(memory_space=pltpu.SMEM),              # lam
            pl.BlockSpec((TM, D), lambda i: (i, 0)),            # x0 (flattened)
            pl.BlockSpec((TM, D), lambda i: (i, 0)),            # x1 (flattened)
            pl.BlockSpec((D, hidden), lambda i: (0, 0)),        # w1
            pl.BlockSpec((hidden, hidden), lambda i: (0, 0)),   # w2
            pl.BlockSpec((hidden, _LANE), lambda i: (0, 0)),    # w3 (lane-padded)
            pl.BlockSpec((3, _LANE), lambda i: (0, 0)),         # coalesced biases
        ],
        out_specs=pl.BlockSpec((TM, _LANE), lambda i: (i, 0)),
        scratch_shapes=[
            pltpu.VMEM((2 * TM, D), jnp.float32),       # stacked block-1 LHS
            pltpu.VMEM((2 * TM, hidden), jnp.float32),  # stacked block-2 LHS
        ],
        compiler_params=pltpu.CompilerParams(
            dimension_semantics=("parallel",)),
    )(k_arr, lam_arr, f0, f1, prep["w1"], prep["w2"], prep["w3p"], prep["ball"])

    return out_p[:, :num_classes]


# ------------------------------ backbone params -----------------------------

def init_params(key, in_features=4 * 16 * 16, hidden=32, num_classes=10):
    k1, k2, k3 = jax.random.split(key, 3)
    scale = 0.02
    return {
        # block 1 (MixupModule): Linear + ReLU
        "w1": (scale * jax.random.normal(k1, (in_features, hidden))).astype(jnp.float32),
        "b1": jnp.zeros((1, hidden), jnp.float32),
        # block 2 (MixupModule): Linear + ReLU
        "w2": (scale * jax.random.normal(k2, (hidden, hidden))).astype(jnp.float32),
        "b2": jnp.zeros((1, hidden), jnp.float32),
        # head: Linear
        "w3": (scale * jax.random.normal(k3, (hidden, num_classes))).astype(jnp.float32),
        "b3": jnp.zeros((1, num_classes), jnp.float32),
    }


def prepare_params(params):
    """One-time kernel-layout prep (hoisted out of the per-call graph):
    lane-pad the head to 128 output columns and coalesce the three biases into
    a single (3, 128) operand."""
    hidden = params["w1"].shape[1]
    nc = params["w3"].shape[1]
    assert nc <= _LANE, f"num_classes={nc} must be <= {_LANE}"
    assert hidden <= _LANE, f"hidden={hidden} must be <= {_LANE}"

    w3p = jnp.pad(params["w3"].astype(jnp.float32), ((0, 0), (0, _LANE - nc)))
    ball = jnp.zeros((3, _LANE), jnp.float32)
    ball = ball.at[0, :hidden].set(params["b1"].reshape(-1).astype(jnp.float32))
    ball = ball.at[1, :hidden].set(params["b2"].reshape(-1).astype(jnp.float32))
    ball = ball.at[2, :nc].set(params["b3"].reshape(-1).astype(jnp.float32))
    return {
        "w1": params["w1"].astype(jnp.float32),
        "w2": params["w2"].astype(jnp.float32),
        "w3p": w3p,
        "ball": ball,
    }


# --------------------------- ManifoldMixupModel ----------------------------

class ManifoldMixupModel:
    """Host-side wrapper: samples lam / k (mirroring the PyTorch module's
    np.random calls and hook bookkeeping) and hands them to the single jitted
    fused kernel as device scalars."""

    def __init__(self, params, alpha=1.0, use_input_mixup=True, seed=0):
        self.params = params
        self.prep = prepare_params(params)           # one-time layout prep
        self.num_classes = int(params["w3"].shape[1])
        self.alpha = alpha
        self.use_input_mixup = use_input_mixup
        self.num_modules = 2  # the two MixupModule blocks of the backbone
        self._rng = np.random.default_rng(seed)
        print(f"{self.num_modules} modules eligible for mixup")

    def forward(self, x, force_k=None):
        x_0, x_1 = x
        lam = float(self._rng.beta(self.alpha, self.alpha))
        l_l = -1 if self.use_input_mixup else 0
        k = int(self._rng.integers(l_l, self.num_modules)) if force_k is None else int(force_k)

        k_arr = jnp.array([k], dtype=jnp.int32)
        lam_arr = jnp.array([lam], dtype=jnp.float32)
        out = _device_forward(k_arr, lam_arr, x_0, x_1, self.prep,
                              num_classes=self.num_classes)
        return out, lam


# ------------------------------ pure-JAX ref -------------------------------

def _ref_forward(x0, x1, params, k, lam):
    def blocks(h, mix_at=None, other=None):
        h = jnp.maximum(h @ params["w1"] + params["b1"], 0.0)
        if mix_at == 0:
            h = lam * h + (1 - lam) * other[0]
        h = jnp.maximum(h @ params["w2"] + params["b2"], 0.0)
        if mix_at == 1:
            h = lam * h + (1 - lam) * other[1]
        return h @ params["w3"] + params["b3"]

    f0 = x0.reshape(x0.shape[0], -1)
    f1 = x1.reshape(x1.shape[0], -1)
    if k == -1:
        return blocks(lam * f0 + (1 - lam) * f1)
    h1a = jnp.maximum(f1 @ params["w1"] + params["b1"], 0.0)
    h1b = jnp.maximum(h1a @ params["w2"] + params["b2"], 0.0)
    return blocks(f0, mix_at=k, other=[h1a, h1b])


# ---------------------------------- main -----------------------------------

if __name__ == "__main__":
    key = jax.random.PRNGKey(0)
    kp, kx0, kx1 = jax.random.split(key, 3)

    N, C, H, W = 2, 4, 16, 16
    x0 = jax.random.normal(kx0, (N, C, H, W), dtype=jnp.float32)
    x1 = jax.random.normal(kx1, (N, C, H, W), dtype=jnp.float32)

    params = init_params(kp, in_features=C * H * W, hidden=32, num_classes=10)
    model = ManifoldMixupModel(params, alpha=1.0, use_input_mixup=True, seed=0)

    # randomly-selected layer (matches the module's np.random-driven behaviour)
    out, lam = model.forward((x0, x1))
    out = jax.block_until_ready(out)

    # exercise every branch (input mixup + both manifold layers) against a
    # pure-JAX reference; all branches share ONE compiled kernel (k is data).
    for k in (-1, 0, 1):
        out_k, lam_k = model.forward((x0, x1), force_k=k)
        out_k = jax.block_until_ready(out_k)
        ref_k = _ref_forward(x0, x1, params, k, lam_k)
        np.testing.assert_allclose(np.asarray(out_k), np.asarray(ref_k),
                                   rtol=1e-5, atol=1e-5)

    print("KERNEL_OK")
</pallas_src>

<mosaic_0001>
module attributes {stable_mosaic.version = 11 : i64} {
  func.func @_fused_kernel(%arg0: i32, %arg1: memref<1xi32, #tpu.memory_space<smem>>, %arg2: memref<1xf32, #tpu.memory_space<smem>>, %arg3: memref<8x1024xf32, #tpu.memory_space<vmem>>, %arg4: memref<8x1024xf32, #tpu.memory_space<vmem>>, %arg5: memref<1024x32xf32, #tpu.memory_space<vmem>>, %arg6: memref<32x32xf32, #tpu.memory_space<vmem>>, %arg7: memref<32x128xf32, #tpu.memory_space<vmem>>, %arg8: memref<3x128xf32, #tpu.memory_space<vmem>>, %arg9: memref<8x128xf32, #tpu.memory_space<vmem>>, %arg10: memref<16x1024xf32, #tpu.memory_space<vmem>>, %arg11: memref<16x32xf32, #tpu.memory_space<vmem>>) attributes {dimension_semantics = [#tpu.dimension_semantics<parallel>], iteration_bounds = array<i64: 1>, scalar_prefetch = 0 : i64, scratch_operands = 2 : i64, tpu.core_type = #tpu.core_type<tc>, window_params = [{transform_indices = @transform_0, window_bounds = array<i64: 1>}, {transform_indices = @transform_1, window_bounds = array<i64: 1>}, {transform_indices = @transform_2, window_bounds = array<i64: 8, 1024>}, {transform_indices = @transform_3, window_bounds = array<i64: 8, 1024>}, {pipeline_mode = #tpu.pipeline_mode<synchronous>, transform_indices = @transform_4, window_bounds = array<i64: 1024, 32>}, {pipeline_mode = #tpu.pipeline_mode<synchronous>, transform_indices = @transform_5, window_bounds = array<i64: 32, 32>}, {pipeline_mode = #tpu.pipeline_mode<synchronous>, transform_indices = @transform_6, window_bounds = array<i64: 32, 128>}, {pipeline_mode = #tpu.pipeline_mode<synchronous>, transform_indices = @transform_7, window_bounds = array<i64: 3, 128>}, {transform_indices = @transform_8, window_bounds = array<i64: 8, 128>}]} {
    %c0 = arith.constant 0 : index
    %0 = memref.load %arg1[%c0] : memref<1xi32, #tpu.memory_space<smem>>
    %c0_0 = arith.constant 0 : index
    %1 = memref.load %arg2[%c0_0] : memref<1xf32, #tpu.memory_space<smem>>
    %c-1_i32 = arith.constant -1 : i32
    %2 = arith.cmpi eq, %0, %c-1_i32 : i32
    %cst = arith.constant 1.000000e+00 : f32
    %3 = arith.select %2, %1, %cst : f32
    %c0_i32 = arith.constant 0 : i32
    %4 = arith.cmpi eq, %0, %c0_i32 : i32
    %cst_1 = arith.constant 1.000000e+00 : f32
    %5 = arith.select %4, %1, %cst_1 : f32
    %c1_i32 = arith.constant 1 : i32
    %6 = arith.cmpi eq, %0, %c1_i32 : i32
    %cst_2 = arith.constant 1.000000e+00 : f32
    %7 = arith.select %6, %1, %cst_2 : f32
    %c0_3 = arith.constant 0 : index
    %c0_4 = arith.constant 0 : index
    %8 = vector.load %arg3[%c0_3, %c0_4] : memref<8x1024xf32, #tpu.memory_space<vmem>>, vector<8x1024xf32>
    %c0_5 = arith.constant 0 : index
    %c0_6 = arith.constant 0 : index
    %9 = vector.load %arg4[%c0_5, %c0_6] : memref<8x1024xf32, #tpu.memory_space<vmem>>, vector<8x1024xf32>
    %10 = arith.subf %8, %9 : vector<8x1024xf32>
    %11 = vector.broadcast %3 : f32 to vector<8x1024xf32>
    %12 = arith.mulf %11, %10 : vector<8x1024xf32>
    %13 = arith.addf %9, %12 : vector<8x1024xf32>
    %c0_7 = arith.constant 0 : index
    %c0_8 = arith.constant 0 : index
    %14 = vector.load %arg10[%c0_7, %c0_8] : memref<16x1024xf32, #tpu.memory_space<vmem>>, vector<8x1024xf32>
    tpu.vector_store %arg10[%c0_7, %c0_8], %13 {strides = array<i32>} : memref<16x1024xf32, #tpu.memory_space<vmem>>, vector<8x1024xf32>,
    %c8 = arith.constant 8 : index
    %c0_9 = arith.constant 0 : index
    %15 = vector.load %arg10[%c8, %c0_9] : memref<16x1024xf32, #tpu.memory_space<vmem>>, vector<8x1024xf32>
    tpu.vector_store %arg10[%c8, %c0_9], %9 {strides = array<i32>} : memref<16x1024xf32, #tpu.memory_space<vmem>>, vector<8x1024xf32>,
    %c0_10 = arith.constant 0 : index
    %c0_11 = arith.constant 0 : index
    %16 = vector.load %arg8[%c0_10, %c0_11] : memref<3x128xf32, #tpu.memory_space<vmem>>, vector<1x32xf32>
    %c1 = arith.constant 1 : index
    %c0_12 = arith.constant 0 : index
    %17 = vector.load %arg8[%c1, %c0_12] : memref<3x128xf32, #tpu.memory_space<vmem>>, vector<1x32xf32>
    %c2 = arith.constant 2 : index
    %c0_13 = arith.constant 0 : index
    %18 = vector.load %arg8[%c2, %c0_13] : memref<3x128xf32, #tpu.memory_space<vmem>>, vector<1x128xf32>
    %c0_14 = arith.constant 0 : index
    %c0_15 = arith.constant 0 : index
    %19 = vector.load %arg10[%c0_14, %c0_15] : memref<16x1024xf32, #tpu.memory_space<vmem>>, vector<16x1024xf32>
    %c0_16 = arith.constant 0 : index
    %c0_17 = arith.constant 0 : index
    %20 = vector.load %arg5[%c0_16, %c0_17] : memref<1024x32xf32, #tpu.memory_space<vmem>>, vector<1024x32xf32>
    %cst_18 = arith.constant dense<0.000000e+00> : vector<16x32xf32>
    %21 = tpu.matmul %19, %20, %cst_18 {dimension_numbers = #tpu.dot_dimension_numbers<[1], [0], [0], [1], [0, 0, 1, 1], [], []>} : vector<16x1024xf32>, vector<1024x32xf32>, vector<16x32xf32> -> vector<16x32xf32>
    %22 = vector.broadcast %16 : vector<1x32xf32> to vector<16x32xf32>
    %23 = arith.addf %21, %22 : vector<16x32xf32>
    %cst_19 = arith.constant 0.000000e+00 : f32
    %24 = vector.broadcast %cst_19 : f32 to vector<16x32xf32>
    %25 = arith.maximumf %23, %24 : vector<16x32xf32>
    %26 = vector.extract_strided_slice %25 {offsets = [0, 0], sizes = [8, 32], strides = [1, 1]} : vector<16x32xf32> to vector<8x32xf32>
    %27 = vector.extract_strided_slice %25 {offsets = [8, 0], sizes = [8, 32], strides = [1, 1]} : vector<16x32xf32> to vector<8x32xf32>
    %28 = arith.subf %26, %27 : vector<8x32xf32>
    %29 = vector.broadcast %5 : f32 to vector<8x32xf32>
    %30 = arith.mulf %29, %28 : vector<8x32xf32>
    %31 = arith.addf %27, %30 : vector<8x32xf32>
    %c0_20 = arith.constant 0 : index
    %c0_21 = arith.constant 0 : index
    %32 = vector.load %arg11[%c0_20, %c0_21] : memref<16x32xf32, #tpu.memory_space<vmem>>, vector<8x32xf32>
    tpu.vector_store %arg11[%c0_20, %c0_21], %31 {strides = array<i32>} : memref<16x32xf32, #tpu.memory_space<vmem>>, vector<8x32xf32>,
    %c8_22 = arith.constant 8 : index
    %c0_23 = arith.constant 0 : index
    %33 = vector.load %arg11[%c8_22, %c0_23] : memref<16x32xf32, #tpu.memory_space<vmem>>, vector<8x32xf32>
    tpu.vector_store %arg11[%c8_22, %c0_23], %27 {strides = array<i32>} : memref<16x32xf32, #tpu.memory_space<vmem>>, vector<8x32xf32>,
    %c0_24 = arith.constant 0 : index
    %c0_25 = arith.constant 0 : index
    %34 = vector.load %arg11[%c0_24, %c0_25] : memref<16x32xf32, #tpu.memory_space<vmem>>, vector<16x32xf32>
    %c0_26 = arith.constant 0 : index
    %c0_27 = arith.constant 0 : index
    %35 = vector.load %arg6[%c0_26, %c0_27] : memref<32x32xf32, #tpu.memory_space<vmem>>, vector<32x32xf32>
    %cst_28 = arith.constant dense<0.000000e+00> : vector<16x32xf32>
    %36 = tpu.matmul %34, %35, %cst_28 {dimension_numbers = #tpu.dot_dimension_numbers<[1], [0], [0], [1], [0, 0, 1, 1], [], []>} : vector<16x32xf32>, vector<32x32xf32>, vector<16x32xf32> -> vector<16x32xf32>
    %37 = vector.broadcast %17 : vector<1x32xf32> to vector<16x32xf32>
    %38 = arith.addf %36, %37 : vector<16x32xf32>
    %cst_29 = arith.constant 0.000000e+00 : f32
    %39 = vector.broadcast %cst_29 : f32 to vector<16x32xf32>
    %40 = arith.maximumf %38, %39 : vector<16x32xf32>
    %41 = vector.extract_strided_slice %40 {offsets = [0, 0], sizes = [8, 32], strides = [1, 1]} : vector<16x32xf32> to vector<8x32xf32>
    %42 = vector.extract_strided_slice %40 {offsets = [8, 0], sizes = [8, 32], strides = [1, 1]} : vector<16x32xf32> to vector<8x32xf32>
    %43 = arith.subf %41, %42 : vector<8x32xf32>
    %44 = vector.broadcast %7 : f32 to vector<8x32xf32>
    %45 = arith.mulf %44, %43 : vector<8x32xf32>
    %46 = arith.addf %42, %45 : vector<8x32xf32>
    %c0_30 = arith.constant 0 : index
    %c0_31 = arith.constant 0 : index
    %47 = vector.load %arg7[%c0_30, %c0_31] : memref<32x128xf32, #tpu.memory_space<vmem>>, vector<32x128xf32>
    %cst_32 = arith.constant dense<0.000000e+00> : vector<8x128xf32>
    %48 = tpu.matmul %46, %47, %cst_32 {dimension_numbers = #tpu.dot_dimension_numbers<[1], [0], [0], [1], [0, 0, 1, 1], [], []>} : vector<8x32xf32>, vector<32x128xf32>, vector<8x128xf32> -> vector<8x128xf32>
    %49 = vector.broadcast %18 : vector<1x128xf32> to vector<8x128xf32>
    %50 = arith.addf %48, %49 : vector<8x128xf32>
    %c0_33 = arith.constant 0 : index
    %c0_34 = arith.constant 0 : index
    %51 = vector.load %arg9[%c0_33, %c0_34] : memref<8x128xf32, #tpu.memory_space<vmem>>, vector<8x128xf32>
    tpu.vector_store %arg9[%c0_33, %c0_34], %50 {strides = array<i32>} : memref<8x128xf32, #tpu.memory_space<vmem>>, vector<8x128xf32>,
    return
  }
  func.func @transform_0(%arg0: i32) -> i32 {
    %c0_i32 = arith.constant 0 : i32
    %c0_i32_0 = arith.constant 0 : i32
    return %c0_i32 : i32
  }
  func.func @transform_1(%arg0: i32) -> i32 {
    %c0_i32 = arith.constant 0 : i32
    %c0_i32_0 = arith.constant 0 : i32
    return %c0_i32 : i32
  }
  func.func @transform_2(%arg0: i32) -> (i32, i32) {
    %c0_i32 = arith.constant 0 : i32
    %c0_i32_0 = arith.constant 0 : i32
    return %arg0, %c0_i32 : i32, i32
  }
  func.func @transform_3(%arg0: i32) -> (i32, i32) {
    %c0_i32 = arith.constant 0 : i32
    %c0_i32_0 = arith.constant 0 : i32
    return %arg0, %c0_i32 : i32, i32
  }
  func.func @transform_4(%arg0: i32) -> (i32, i32) {
    %c0_i32 = arith.constant 0 : i32
    %c0_i32_0 = arith.constant 0 : i32
    %c0_i32_1 = arith.constant 0 : i32
    return %c0_i32, %c0_i32_0 : i32, i32
  }
  func.func @transform_5(%arg0: i32) -> (i32, i32) {
    %c0_i32 = arith.constant 0 : i32
    %c0_i32_0 = arith.constant 0 : i32
    %c0_i32_1 = arith.constant 0 : i32
    return %c0_i32, %c0_i32_0 : i32, i32
  }
  func.func @transform_6(%arg0: i32) -> (i32, i32) {
    %c0_i32 = arith.constant 0 : i32
    %c0_i32_0 = arith.constant 0 : i32
    %c0_i32_1 = arith.constant 0 : i32
    return %c0_i32, %c0_i32_0 : i32, i32
  }
  func.func @transform_7(%arg0: i32) -> (i32, i32) {
    %c0_i32 = arith.constant 0 : i32
    %c0_i32_0 = arith.constant 0 : i32
    %c0_i32_1 = arith.constant 0 : i32
    return %c0_i32, %c0_i32_0 : i32, i32
  }
  func.func @transform_8(%arg0: i32) -> (i32, i32) {
    %c0_i32 = arith.constant 0 : i32
    %c0_i32_0 = arith.constant 0 : i32
    return %arg0, %c0_i32 : i32, i32
  }
}

</mosaic_0001>

<llo_original>
// kernel: _device_forward.1
$region0: #{_device_forward.1}
  #allocation0 [shape = 'u32[]', space=smem, size = 0x4, offset = 0x4, fixed_abs, tag = 'smem constant byte address 0x4 - core index']
  #allocation1 [shape = 'u32[144,128]{1,0:T(1,128)}', space=vmem, size = 0x12000, scoped, tag = 'internal scratch']
  #allocation2 [shape = 'f32[16,1024]{1,0:T(8,128)}', space=vmem, size = 0x10000, scoped, tag = 'scratch operand']
  #allocation3 [shape = 'f32[16,32]{1,0:T(8,128)}', space=vmem, size = 0x2000, scoped, tag = 'scratch operand']
  #allocation4 [shape = 's32[1]{0:T(128)S(6)}', space=smem, size = 0x200, scoped, tag = 'scoped memory for _device_forward.1']
  #allocation5 [shape = 'f32[1]{0:T(128)S(6)}', space=smem, size = 0x200, scoped, tag = 'scoped memory for _device_forward.1']
  %s0 = inlined_call_operand.<no memory space> [shape: s32[1], index: 0, kind: input, shape index: {}]
  %s1 = inlined_call_operand.<no memory space> [shape: f32[1], index: 1, kind: input, shape index: {}]
  %s2 = inlined_call_operand.vmem [shape: f32[2,1024], index: 2, kind: input, shape index: {}]
  %s3 = inlined_call_operand.vmem [shape: f32[2,1024], index: 3, kind: input, shape index: {}]
  %s4 = inlined_call_operand.vmem [shape: f32[1024,32], index: 4, kind: input, shape index: {}]
  %s5 = inlined_call_operand.vmem [shape: f32[32,32], index: 5, kind: input, shape index: {}]
  %s6 = inlined_call_operand.vmem [shape: f32[32,128], index: 6, kind: input, shape index: {}]
  %s7 = inlined_call_operand.vmem [shape: f32[3,128], index: 7, kind: input, shape index: {}]
  %s8 = inlined_call_operand.hbm [shape: f32[2,128], index: 8, kind: output, shape index: {}]
  %s9 = sld [smem:[#allocation0]]
  $region42: #{_device_forward.1} parent=0
    _
  %s11 = ssub.s32 1, %s9
  %s12 = scalar_select 0, %s11, %s9
  %13 = sst [smem:[#allocation4]] %s0
  %14 = sst [smem:[#allocation5]] %s1
  $region1: #{_device_forward.1} parent=0
    #allocation6 [shape = 'u8[4096]{0}', space=vmem, size = 0x1000, scoped, tag = 'output window, operand 0, single buffered']
    #allocation7 [shape = 's32[1]{0}', space=sflag, size = 0x4, scoped, tag = 'scoped memory for _device_forward.1']
    %15 = vsyncpa [#allocation7], 0
    // Predicated region
    $region2: #{_device_forward.1} parent=1 // pred_check
      _
    $region3: #{_device_forward.1} parent=1 // pred_check_branch
      %17 = sbr.rel (0) target = $region5
    $region4: #{_device_forward.1} parent=1 // pred_region
      _
    $region5: #{_device_forward.1} parent=1 // pred_fallthru
      _
    // Predicated region
    $region6: #{_device_forward.1} parent=1 // pred_check
      _
    $region7: #{_device_forward.1} parent=1 // pred_check_branch
      %19 = sbr.rel (0) target = $region9
    $region8: #{_device_forward.1} parent=1 // pred_region
      _
    $region9: #{_device_forward.1} parent=1 // pred_fallthru
      _
    // Predicated region
    $region10: #{_device_forward.1} parent=1 // pred_check
      _
    $region11: #{_device_forward.1} parent=1 // pred_check_branch
      %21 = sbr.rel (0) target = $region13
    $region12: #{_device_forward.1} parent=1 // pred_region
      _
    $region13: #{_device_forward.1} parent=1 // pred_fallthru
      _
    // Predicated region
    $region14: #{_device_forward.1} parent=1 // pred_check
      _
    $region15: #{_device_forward.1} parent=1 // pred_check_branch
      %23 = sbr.rel (0) target = $region17
    $region16: #{_device_forward.1} parent=1 // pred_region
      _
    $region17: #{_device_forward.1} parent=1 // pred_fallthru
      _
    // Predicated region
    $region18: #{_device_forward.1} parent=1 // pred_check
      _
    $region19: #{_device_forward.1} parent=1 // pred_check_branch
      %25 = sbr.rel (0) target = $region21
    $region20: #{_device_forward.1} parent=1 // pred_region
      _
    $region21: #{_device_forward.1} parent=1 // pred_fallthru
      _
    // Predicated region
    $region22: #{_device_forward.1} parent=1 // pred_check
      _
    $region23: #{_device_forward.1} parent=1 // pred_check_branch
      %27 = sbr.rel (0) target = $region25
    $region24: #{_device_forward.1} parent=1 // pred_region
      _
    $region25: #{_device_forward.1} parent=1 // pred_fallthru
      _
    // Predicated region
    $region26: #{_device_forward.1} parent=1 // pred_check
      _
    $region27: #{_device_forward.1} parent=1 // pred_check_branch
      %29 = sbr.rel (0) target = $region29
    $region28: #{_device_forward.1} parent=1 // pred_region
      _
    $region29: #{_device_forward.1} parent=1 // pred_fallthru
      _
    // Predicated region
    $region30: #{_device_forward.1} parent=1 // pred_check
      _
    $region31: #{_device_forward.1} parent=1 // pred_check_branch
      %31 = sbr.rel (0) target = $region33
    $region32: #{_device_forward.1} parent=1 // pred_region
      _
    $region33: #{_device_forward.1} parent=1 // pred_fallthru
      _
    %s32 = sld [smem:[#allocation4]]
    %s33 = sld [smem:[#allocation5]]
    %p34 = scmp.eq.s32.totalorder %s32, 4294967295
    %s35 = scalar_select %p34, %s33, 1.0
    %p36 = scmp.eq.s32.totalorder %s32, 0
    %s37 = scalar_select %p36, %s33, 1.0
    %p38 = scmp.eq.s32.totalorder %s32, 1
    %s39 = scalar_select %p38, %s33, 1.0
    %v40 = vld [vmem:[%s2] sm:$0xff]
    %v41 = vld [vmem:[%s2 + $0x8] sm:$0xff]
    %v42 = vld [vmem:[%s2 + $0x10] sm:$0xff]
    %v43 = vld [vmem:[%s2 + $0x18] sm:$0xff]
    %v44 = vld [vmem:[%s2 + $0x20] sm:$0xff]
    %v45 = vld [vmem:[%s2 + $0x28] sm:$0xff]
    %v46 = vld [vmem:[%s2 + $0x30] sm:$0xff]
    %v47 = vld [vmem:[%s2 + $0x38] sm:$0xff]
    %v48 = vld [vmem:[%s3] sm:$0xff]
    %v49 = vld [vmem:[%s3 + $0x8] sm:$0xff]
    %v50 = vld [vmem:[%s3 + $0x10] sm:$0xff]
    %v51 = vld [vmem:[%s3 + $0x18] sm:$0xff]
    %v52 = vld [vmem:[%s3 + $0x20] sm:$0xff]
    %v53 = vld [vmem:[%s3 + $0x28] sm:$0xff]
    %v54 = vld [vmem:[%s3 + $0x30] sm:$0xff]
    %v55 = vld [vmem:[%s3 + $0x38] sm:$0xff]
    %v56 = vsub.f32 %v40, %v48
    %v57 = vsub.f32 %v41, %v49
    %v58 = vsub.f32 %v42, %v50
    %v59 = vsub.f32 %v43, %v51
    %v60 = vsub.f32 %v44, %v52
    %v61 = vsub.f32 %v45, %v53
    %v62 = vsub.f32 %v46, %v54
    %v63 = vsub.f32 %v47, %v55
    %v64 = vstv %s35
    %v65 = vmul.f32 %v64, %v56
    %v66 = vmul.f32 %v64, %v57
    %v67 = vmul.f32 %v64, %v58
    %v68 = vmul.f32 %v64, %v59
    %v69 = vmul.f32 %v64, %v60
    %v70 = vmul.f32 %v64, %v61
    %v71 = vmul.f32 %v64, %v62
    %v72 = vmul.f32 %v64, %v63
    %v73 = vadd.f32 %v48, %v65
    %v74 = vadd.f32 %v49, %v66
    %v75 = vadd.f32 %v50, %v67
    %v76 = vadd.f32 %v51, %v68
    %v77 = vadd.f32 %v52, %v69
    %v78 = vadd.f32 %v53, %v70
    %v79 = vadd.f32 %v54, %v71
    %v80 = vadd.f32 %v55, %v72
    %v89 = vcombine.low %v73, %v75
    %v90 = vcombine.high %v73, %v75
    %v91 = vcombine.low %v77, %v79
    %v92 = vcombine.high %v77, %v79
    %v94 = vunpack.c.l.s4 1983009808
    %v95 = vunpack.c.0.s8 %v94
    %v96 = vlaneseq
    %v97 = vshrl.u32 %v96, 7
    %v98 = vsub.s32 %v95, %v97
    %v99 = vrot.slane %v89, %v98
    %v101 = vunpack.c.l.s4 1983009808
    %v102 = vunpack.c.0.s8 %v101
    %v103 = vlaneseq
    %v104 = vshrl.u32 %v103, 7
    %v105 = vsub.s32 %v102, %v104
    %v106 = vrot.slane %v90, %v105
    %v108 = vunpack.c.l.s4 1983009808
    %v109 = vunpack.c.0.s8 %v108
    %v110 = vlaneseq
    %v111 = vshrl.u32 %v110, 7
    %v112 = vsub.s32 %v109, %v111
    %v113 = vrot.slane %v91, %v112
    %v115 = vunpack.c.l.s4 1983009808
    %v116 = vunpack.c.0.s8 %v115
    %v117 = vlaneseq
    %v118 = vshrl.u32 %v117, 7
    %v119 = vsub.s32 %v116, %v118
    %v120 = vrot.slane %v92, %v119
    %v121 = vcombine.low %v99, %v113
    %v122 = vcombine.high %v99, %v113
    %v123 = vcombine.low %v106, %v120
    %v124 = vcombine.high %v106, %v120
    %v125 = vcombine.low %v74, %v76
    %v126 = vcombine.high %v74, %v76
    %v127 = vcombine.low %v78, %v80
    %v128 = vcombine.high %v78, %v80
    %v130 = vunpack.c.l.s4 1983009808
    %v131 = vunpack.c.0.s8 %v130
    %v132 = vlaneseq
    %v133 = vshrl.u32 %v132, 7
    %v134 = vsub.s32 %v131, %v133
    %v135 = vrot.slane %v125, %v134
    %v137 = vunpack.c.l.s4 1983009808
    %v138 = vunpack.c.0.s8 %v137
    %v139 = vlaneseq
    %v140 = vshrl.u32 %v139, 7
    %v141 = vsub.s32 %v138, %v140
    %v142 = vrot.slane %v126, %v141
    %v144 = vunpack.c.l.s4 1983009808
    %v145 = vunpack.c.0.s8 %v144
    %v146 = vlaneseq
    %v147 = vshrl.u32 %v146, 7
    %v148 = vsub.s32 %v145, %v147
    %v149 = vrot.slane %v127, %v148
    %v151 = vunpack.c.l.s4 1983009808
    %v152 = vunpack.c.0.s8 %v151
    %v153 = vlaneseq
    %v154 = vshrl.u32 %v153, 7
    %v155 = vsub.s32 %v152, %v154
    %v156 = vrot.slane %v128, %v155
    %v157 = vcombine.low %v135, %v149
    %v158 = vcombine.high %v135, %v149
    %v159 = vcombine.low %v142, %v156
    %v160 = vcombine.high %v142, %v156
    %169 = vst [vmem:[#allocation2] sm:$0xff] %v121
    %170 = vst [vmem:[#allocation2 + $0x8] sm:$0xff] %v122
    %171 = vst [vmem:[#allocation2 + $0x10] sm:$0xff] %v123
    %172 = vst [vmem:[#allocation2 + $0x18] sm:$0xff] %v124
    %173 = vst [vmem:[#allocation2 + $0x20] sm:$0xff] %v157
    %174 = vst [vmem:[#allocation2 + $0x28] sm:$0xff] %v158
    %175 = vst [vmem:[#allocation2 + $0x30] sm:$0xff] %v159
    %176 = vst [vmem:[#allocation2 + $0x38] sm:$0xff] %v160
    %v185 = vcombine.low %v48, %v50
    %v186 = vcombine.high %v48, %v50
    %v187 = vcombine.low %v52, %v54
    %v188 = vcombine.high %v52, %v54
    %v190 = vunpack.c.l.s4 1983009808
    %v191 = vunpack.c.0.s8 %v190
    %v192 = vlaneseq
    %v193 = vshrl.u32 %v192, 7
    %v194 = vsub.s32 %v191, %v193
    %v195 = vrot.slane %v185, %v194
    %v197 = vunpack.c.l.s4 1983009808
    %v198 = vunpack.c.0.s8 %v197
    %v199 = vlaneseq
    %v200 = vshrl.u32 %v199, 7
    %v201 = vsub.s32 %v198, %v200
    %v202 = vrot.slane %v186, %v201
    %v204 = vunpack.c.l.s4 1983009808
    %v205 = vunpack.c.0.s8 %v204
    %v206 = vlaneseq
    %v207 = vshrl.u32 %v206, 7
    %v208 = vsub.s32 %v205, %v207
    %v209 = vrot.slane %v187, %v208
    %v211 = vunpack.c.l.s4 1983009808
    %v212 = vunpack.c.0.s8 %v211
    %v213 = vlaneseq
    %v214 = vshrl.u32 %v213, 7
    %v215 = vsub.s32 %v212, %v214
    %v216 = vrot.slane %v188, %v215
    %v217 = vcombine.low %v195, %v209
    %v218 = vcombine.high %v195, %v209
    %v219 = vcombine.low %v202, %v216
    %v220 = vcombine.high %v202, %v216
    %v221 = vcombine.low %v49, %v51
    %v222 = vcombine.high %v49, %v51
    %v223 = vcombine.low %v53, %v55
    %v224 = vcombine.high %v53, %v55
    %v226 = vunpack.c.l.s4 1983009808
    %v227 = vunpack.c.0.s8 %v226
    %v228 = vlaneseq
    %v229 = vshrl.u32 %v228, 7
    %v230 = vsub.s32 %v227, %v229
    %v231 = vrot.slane %v221, %v230
    %v233 = vunpack.c.l.s4 1983009808
    %v234 = vunpack.c.0.s8 %v233
    %v235 = vlaneseq
    %v236 = vshrl.u32 %v235, 7
    %v237 = vsub.s32 %v234, %v236
    %v238 = vrot.slane %v222, %v237
    %v240 = vunpack.c.l.s4 1983009808
    %v241 = vunpack.c.0.s8 %v240
    %v242 = vlaneseq
    %v243 = vshrl.u32 %v242, 7
    %v244 = vsub.s32 %v241, %v243
    %v245 = vrot.slane %v223, %v244
    %v247 = vunpack.c.l.s4 1983009808
    %v248 = vunpack.c.0.s8 %v247
    %v249 = vlaneseq
    %v250 = vshrl.u32 %v249, 7
    %v251 = vsub.s32 %v248, %v250
    %v252 = vrot.slane %v224, %v251
    %v253 = vcombine.low %v231, %v245
    %v254 = vcombine.high %v231, %v245
    %v255 = vcombine.low %v238, %v252
    %v256 = vcombine.high %v238, %v252
    %265 = vst [vmem:[#allocation2 + $0x40] sm:$0xff] %v217
    %266 = vst [vmem:[#allocation2 + $0x48] sm:$0xff] %v218
    %267 = vst [vmem:[#allocation2 + $0x50] sm:$0xff] %v219
    %268 = vst [vmem:[#allocation2 + $0x58] sm:$0xff] %v220
    %269 = vst [vmem:[#allocation2 + $0x60] sm:$0xff] %v253
    %270 = vst [vmem:[#allocation2 + $0x68] sm:$0xff] %v254
    %271 = vst [vmem:[#allocation2 + $0x70] sm:$0xff] %v255
    %272 = vst [vmem:[#allocation2 + $0x78] sm:$0xff] %v256
    %v273 = vld [vmem:[%s7] sm:$0x1]
    %v274 = vld [vmem:[%s7 + $0x1] sm:$0x1]
    %v275 = vld [vmem:[%s7 + $0x2] sm:$0x1]
    %v276 = vld [vmem:[#allocation2] sm:$0xff]
    %v277 = vld [vmem:[#allocation2 + $0x8] sm:$0xff]
    %v278 = vld [vmem:[#allocation2 + $0x10] sm:$0xff]
    %v279 = vld [vmem:[#allocation2 + $0x18] sm:$0xff]
    %v280 = vld [vmem:[#allocation2 + $0x20] sm:$0xff]
    %v281 = vld [vmem:[#allocation2 + $0x28] sm:$0xff]
    %v282 = vld [vmem:[#allocation2 + $0x30] sm:$0xff]
    %v283 = vld [vmem:[#allocation2 + $0x38] sm:$0xff]
    %v284 = vld [vmem:[#allocation2 + $0x40] sm:$0xff]
    %v285 = vld [vmem:[#allocation2 + $0x48] sm:$0xff]
    %v286 = vld [vmem:[#allocation2 + $0x50] sm:$0xff]
    %v287 = vld [vmem:[#allocation2 + $0x58] sm:$0xff]
    %v288 = vld [vmem:[#allocation2 + $0x60] sm:$0xff]
    %v289 = vld [vmem:[#allocation2 + $0x68] sm:$0xff]
    %v290 = vld [vmem:[#allocation2 + $0x70] sm:$0xff]
    %v291 = vld [vmem:[#allocation2 + $0x78] sm:$0xff]
    %v292 = vld [vmem:[%s4] sm:$0xff]
    %v293 = vld [vmem:[%s4 + $0x8] sm:$0xff]
    %v294 = vld [vmem:[%s4 + $0x10] sm:$0xff]
    %v295 = vld [vmem:[%s4 + $0x18] sm:$0xff]
    %v296 = vld [vmem:[%s4 + $0x20] sm:$0xff]
    %v297 = vld [vmem:[%s4 + $0x28] sm:$0xff]
    %v298 = vld [vmem:[%s4 + $0x30] sm:$0xff]
    %v299 = vld [vmem:[%s4 + $0x38] sm:$0xff]
    %v300 = vld [vmem:[%s4 + $0x40] sm:$0xff]
    %v301 = vld [vmem:[%s4 + $0x48] sm:$0xff]
    %v302 = vld [vmem:[%s4 + $0x50] sm:$0xff]
    %v303 = vld [vmem:[%s4 + $0x58] sm:$0xff]
    %v304 = vld [vmem:[%s4 + $0x60] sm:$0xff]
    %v305 = vld [vmem:[%s4 + $0x68] sm:$0xff]
    %v306 = vld [vmem:[%s4 + $0x70] sm:$0xff]
    %v307 = vld [vmem:[%s4 + $0x78] sm:$0xff]
    %v308 = vld [vmem:[%s4 + $0x80] sm:$0xff]
    %v309 = vld [vmem:[%s4 + $0x88] sm:$0xff]
    %v310 = vld [vmem:[%s4 + $0x90] sm:$0xff]
    %v311 = vld [vmem:[%s4 + $0x98] sm:$0xff]
    %v312 = vld [vmem:[%s4 + $0xa0] sm:$0xff]
    %v313 = vld [vmem:[%s4 + $0xa8] sm:$0xff]
    %v314 = vld [vmem:[%s4 + $0xb0] sm:$0xff]
    %v315 = vld [vmem:[%s4 + $0xb8] sm:$0xff]
    %v316 = vld [vmem:[%s4 + $0xc0] sm:$0xff]
    %v317 = vld [vmem:[%s4 + $0xc8] sm:$0xff]
    %v318 = vld [vmem:[%s4 + $0xd0] sm:$0xff]
    %v319 = vld [vmem:[%s4 + $0xd8] sm:$0xff]
    %v320 = vld [vmem:[%s4 + $0xe0] sm:$0xff]
    %v321 = vld [vmem:[%s4 + $0xe8] sm:$0xff]
    %v322 = vld [vmem:[%s4 + $0xf0] sm:$0xff]
    %v323 = vld [vmem:[%s4 + $0xf8] sm:$0xff]
    %v324 = vld [vmem:[%s4 + $0x100] sm:$0xff]
    %v325 = vld [vmem:[%s4 + $0x108] sm:$0xff]
    %v326 = vld [vmem:[%s4 + $0x110] sm:$0xff]
    %v327 = vld [vmem:[%s4 + $0x118] sm:$0xff]
    %v328 = vld [vmem:[%s4 + $0x120] sm:$0xff]
    %v329 = vld [vmem:[%s4 + $0x128] sm:$0xff]
    %v330 = vld [vmem:[%s4 + $0x130] sm:$0xff]
    %v331 = vld [vmem:[%s4 + $0x138] sm:$0xff]
    %v332 = vld [vmem:[%s4 + $0x140] sm:$0xff]
    %v333 = vld [vmem:[%s4 + $0x148] sm:$0xff]
    %v334 = vld [vmem:[%s4 + $0x150] sm:$0xff]
    %v335 = vld [vmem:[%s4 + $0x158] sm:$0xff]
    %v336 = vld [vmem:[%s4 + $0x160] sm:$0xff]
    %v337 = vld [vmem:[%s4 + $0x168] sm:$0xff]
    %v338 = vld [vmem:[%s4 + $0x170] sm:$0xff]
    %v339 = vld [vmem:[%s4 + $0x178] sm:$0xff]
    %v340 = vld [vmem:[%s4 + $0x180] sm:$0xff]
    %v341 = vld [vmem:[%s4 + $0x188] sm:$0xff]
    %v342 = vld [vmem:[%s4 + $0x190] sm:$0xff]
    %v343 = vld [vmem:[%s4 + $0x198] sm:$0xff]
    %v344 = vld [vmem:[%s4 + $0x1a0] sm:$0xff]
    %v345 = vld [vmem:[%s4 + $0x1a8] sm:$0xff]
    %v346 = vld [vmem:[%s4 + $0x1b0] sm:$0xff]
    %v347 = vld [vmem:[%s4 + $0x1b8] sm:$0xff]
    %v348 = vld [vmem:[%s4 + $0x1c0] sm:$0xff]
    %v349 = vld [vmem:[%s4 + $0x1c8] sm:$0xff]
    %v350 = vld [vmem:[%s4 + $0x1d0] sm:$0xff]
    %v351 = vld [vmem:[%s4 + $0x1d8] sm:$0xff]
    %v352 = vld [vmem:[%s4 + $0x1e0] sm:$0xff]
    %v353 = vld [vmem:[%s4 + $0x1e8] sm:$0xff]
    %v354 = vld [vmem:[%s4 + $0x1f0] sm:$0xff]
    %v355 = vld [vmem:[%s4 + $0x1f8] sm:$0xff]
    %v356 = vld [vmem:[%s4 + $0x200] sm:$0xff]
    %v357 = vld [vmem:[%s4 + $0x208] sm:$0xff]
    %v358 = vld [vmem:[%s4 + $0x210] sm:$0xff]
    %v359 = vld [vmem:[%s4 + $0x218] sm:$0xff]
    %v360 = vld [vmem:[%s4 + $0x220] sm:$0xff]
    %v361 = vld [vmem:[%s4 + $0x228] sm:$0xff]
    %v362 = vld [vmem:[%s4 + $0x230] sm:$0xff]
    %v363 = vld [vmem:[%s4 + $0x238] sm:$0xff]
    %v364 = vld [vmem:[%s4 + $0x240] sm:$0xff]
    %v365 = vld [vmem:[%s4 + $0x248] sm:$0xff]
    %v366 = vld [vmem:[%s4 + $0x250] sm:$0xff]
    %v367 = vld [vmem:[%s4 + $0x258] sm:$0xff]
    %v368 = vld [vmem:[%s4 + $0x260] sm:$0xff]
    %v369 = vld [vmem:[%s4 + $0x268] sm:$0xff]
    %v370 = vld [vmem:[%s4 + $0x270] sm:$0xff]
    %v371 = vld [vmem:[%s4 + $0x278] sm:$0xff]
    %v372 = vld [vmem:[%s4 + $0x280] sm:$0xff]
    %v373 = vld [vmem:[%s4 + $0x288] sm:$0xff]
    %v374 = vld [vmem:[%s4 + $0x290] sm:$0xff]
    %v375 = vld [vmem:[%s4 + $0x298] sm:$0xff]
    %v376 = vld [vmem:[%s4 + $0x2a0] sm:$0xff]
    %v377 = vld [vmem:[%s4 + $0x2a8] sm:$0xff]
    %v378 = vld [vmem:[%s4 + $0x2b0] sm:$0xff]
    %v379 = vld [vmem:[%s4 + $0x2b8] sm:$0xff]
    %v380 = vld [vmem:[%s4 + $0x2c0] sm:$0xff]
    %v381 = vld [vmem:[%s4 + $0x2c8] sm:$0xff]
    %v382 = vld [vmem:[%s4 + $0x2d0] sm:$0xff]
    %v383 = vld [vmem:[%s4 + $0x2d8] sm:$0xff]
    %v384 = vld [vmem:[%s4 + $0x2e0] sm:$0xff]
    %v385 = vld [vmem:[%s4 + $0x2e8] sm:$0xff]
    %v386 = vld [vmem:[%s4 + $0x2f0] sm:$0xff]
    %v387 = vld [vmem:[%s4 + $0x2f8] sm:$0xff]
    %v388 = vld [vmem:[%s4 + $0x300] sm:$0xff]
    %v389 = vld [vmem:[%s4 + $0x308] sm:$0xff]
    %v390 = vld [vmem:[%s4 + $0x310] sm:$0xff]
    %v391 = vld [vmem:[%s4 + $0x318] sm:$0xff]
    %v392 = vld [vmem:[%s4 + $0x320] sm:$0xff]
    %v393 = vld [vmem:[%s4 + $0x328] sm:$0xff]
    %v394 = vld [vmem:[%s4 + $0x330] sm:$0xff]
    %v395 = vld [vmem:[%s4 + $0x338] sm:$0xff]
    %v396 = vld [vmem:[%s4 + $0x340] sm:$0xff]
    %v397 = vld [vmem:[%s4 + $0x348] sm:$0xff]
    %v398 = vld [vmem:[%s4 + $0x350] sm:$0xff]
    %v399 = vld [vmem:[%s4 + $0x358] sm:$0xff]
    %v400 = vld [vmem:[%s4 + $0x360] sm:$0xff]
    %v401 = vld [vmem:[%s4 + $0x368] sm:$0xff]
    %v402 = vld [vmem:[%s4 + $0x370] sm:$0xff]
    %v403 = vld [vmem:[%s4 + $0x378] sm:$0xff]
    %v404 = vld [vmem:[%s4 + $0x380] sm:$0xff]
    %v405 = vld [vmem:[%s4 + $0x388] sm:$0xff]
    %v406 = vld [vmem:[%s4 + $0x390] sm:$0xff]
    %v407 = vld [vmem:[%s4 + $0x398] sm:$0xff]
    %v408 = vld [vmem:[%s4 + $0x3a0] sm:$0xff]
    %v409 = vld [vmem:[%s4 + $0x3a8] sm:$0xff]
    %v410 = vld [vmem:[%s4 + $0x3b0] sm:$0xff]
    %v411 = vld [vmem:[%s4 + $0x3b8] sm:$0xff]
    %v412 = vld [vmem:[%s4 + $0x3c0] sm:$0xff]
    %v413 = vld [vmem:[%s4 + $0x3c8] sm:$0xff]
    %v414 = vld [vmem:[%s4 + $0x3d0] sm:$0xff]
    %v415 = vld [vmem:[%s4 + $0x3d8] sm:$0xff]
    %v416 = vld [vmem:[%s4 + $0x3e0] sm:$0xff]
    %v417 = vld [vmem:[%s4 + $0x3e8] sm:$0xff]
    %v418 = vld [vmem:[%s4 + $0x3f0] sm:$0xff]
    %v419 = vld [vmem:[%s4 + $0x3f8] sm:$0xff]
    %v420 = vlaneseq
    %v421 = vshrl.u32 %v420, 7
    %v422 = vsub.s32 0, %v421
    %v423 = vrot.slane %v273, %v422
    %424 = vmatprep.subr.mxu0 0.0
    %425 = vmatpush1.msra.mxu0 %v292
    %426 = vmatprep.subr.mxu0 0.0
    %427 = vmatpush1.msra.mxu0 %v293
    %428 = vmatprep.subr.mxu0 0.0
    %429 = vmatpush1.msra.mxu0 %v294
    %430 = vmatprep.subr.mxu0 0.0
    %431 = vmatpush1.msra.mxu0 %v295
    %432 = vmatprep.subr.mxu0 0.0
    %433 = vmatpush1.msra.mxu0 %v296
    %434 = vmatprep.subr.mxu0 0.0
    %435 = vmatpush1.msra.mxu0 %v297
    %436 = vmatprep.subr.mxu0 0.0
    %437 = vmatpush1.msra.mxu0 %v298
    %438 = vmatprep.subr.mxu0 0.0
    %439 = vmatpush1.msra.mxu0 %v299
    %440 = vmatprep.subr.mxu0 0.0
    %441 = vmatpush1.msra.mxu0 %v300
    %442 = vmatprep.subr.mxu0 0.0
    %443 = vmatpush1.msra.mxu0 %v301
    %444 = vmatprep.subr.mxu0 0.0
    %445 = vmatpush1.msra.mxu0 %v302
    %446 = vmatprep.subr.mxu0 0.0
    %447 = vmatpush1.msra.mxu0 %v303
    %448 = vmatprep.subr.mxu0 0.0
    %449 = vmatpush1.msra.mxu0 %v304
    %450 = vmatprep.subr.mxu0 0.0
    %451 = vmatpush1.msra.mxu0 %v305
    %452 = vmatprep.subr.mxu0 0.0
    %453 = vmatpush1.msra.mxu0 %v306
    %454 = vmatprep.subr.mxu0 0.0
    %455 = vmatpush1.msra.mxu0 %v307
    %456 = vmatprep.subr.mxu0 0.0
    %457 = vmatpush1.msra.mxu0 %v308
    %458 = vmatprep.subr.mxu0 0.0
    %459 = vmatpush1.msra.mxu0 %v309
    %460 = vmatprep.subr.mxu0 0.0
    %461 = vmatpush1.msra.mxu0 %v310
    %462 = vmatprep.subr.mxu0 0.0
    %463 = vmatpush1.msra.mxu0 %v311
    %464 = vmatprep.subr.mxu0 0.0
    %465 = vmatpush1.msra.mxu0 %v312
    %466 = vmatprep.subr.mxu0 0.0
    %467 = vmatpush1.msra.mxu0 %v313
    %468 = vmatprep.subr.mxu0 0.0
    %469 = vmatpush1.msra.mxu0 %v314
    %470 = vmatprep.subr.mxu0 0.0
    %471 = vmatpush1.msra.mxu0 %v315
    %472 = vmatprep.subr.mxu0 0.0
    %473 = vmatpush1.msra.mxu0 %v316
    %474 = vmatprep.subr.mxu0 0.0
    %475 = vmatpush1.msra.mxu0 %v317
    %476 = vmatprep.subr.mxu0 0.0
    %477 = vmatpush1.msra.mxu0 %v318
    %478 = vmatprep.subr.mxu0 0.0
    %479 = vmatpush1.msra.mxu0 %v319
    %480 = vmatprep.subr.mxu0 0.0
    %481 = vmatpush1.msra.mxu0 %v320
    %482 = vmatprep.subr.mxu0 0.0
    %483 = vmatpush1.msra.mxu0 %v321
    %484 = vmatprep.subr.mxu0 0.0
    %485 = vmatpush1.msra.mxu0 %v322
    %486 = vmatprep.subr.mxu0 0.0
    %487 = vmatpush1.msra.mxu0 %v323
    %488 = vmatprep.mubr.f32.mxu0 %v277
    %489 = vmatmul.mubr.f32.gmra.mrb[0].mxu0 %v276
    %v490 = vpop.f32.mrb[0].mxu0
    %v491 = vadd.f32 %v423, %v490
    %v492 = vpop.f32.mrb[0].mxu0
    %493 = vmatprep.mubr.f32.mxu0 %v285
    %494 = vmatmul.mubr.f32.gmra.mrb[0].mxu0 %v284
    %v495 = vpop.f32.mrb[0].mxu0
    %v496 = vadd.f32 %v423, %v495
    %v497 = vpop.f32.mrb[0].mxu0
    %498 = vdwg.mxu0
    %499 = vmatprep.subr.mxu0 0.0
    %500 = vmatpush1.msra.mxu0 %v324
    %501 = vmatprep.subr.mxu0 0.0
    %502 = vmatpush1.msra.mxu0 %v325
    %503 = vmatprep.subr.mxu0 0.0
    %504 = vmatpush1.msra.mxu0 %v326
    %505 = vmatprep.subr.mxu0 0.0
    %506 = vmatpush1.msra.mxu0 %v327
    %507 = vmatprep.subr.mxu0 0.0
    %508 = vmatpush1.msra.mxu0 %v328
    %509 = vmatprep.subr.mxu0 0.0
    %510 = vmatpush1.msra.mxu0 %v329
    %511 = vmatprep.subr.mxu0 0.0
    %512 = vmatpush1.msra.mxu0 %v330
    %513 = vmatprep.subr.mxu0 0.0
    %514 = vmatpush1.msra.mxu0 %v331
    %515 = vmatprep.subr.mxu0 0.0
    %516 = vmatpush1.msra.mxu0 %v332
    %517 = vmatprep.subr.mxu0 0.0
    %518 = vmatpush1.msra.mxu0 %v333
    %519 = vmatprep.subr.mxu0 0.0
    %520 = vmatpush1.msra.mxu0 %v334
    %521 = vmatprep.subr.mxu0 0.0
    %522 = vmatpush1.msra.mxu0 %v335
    %523 = vmatprep.subr.mxu0 0.0
    %524 = vmatpush1.msra.mxu0 %v336
    %525 = vmatprep.subr.mxu0 0.0
    %526 = vmatpush1.msra.mxu0 %v337
    %527 = vmatprep.subr.mxu0 0.0
    %528 = vmatpush1.msra.mxu0 %v338
    %529 = vmatprep.subr.mxu0 0.0
    %530 = vmatpush1.msra.mxu0 %v339
    %531 = vmatprep.subr.mxu0 0.0
    %532 = vmatpush1.msra.mxu0 %v340
    %533 = vmatprep.subr.mxu0 0.0
    %534 = vmatpush1.msra.mxu0 %v341
    %535 = vmatprep.subr.mxu0 0.0
    %536 = vmatpush1.msra.mxu0 %v342
    %537 = vmatprep.subr.mxu0 0.0
    %538 = vmatpush1.msra.mxu0 %v343
    %539 = vmatprep.subr.mxu0 0.0
    %540 = vmatpush1.msra.mxu0 %v344
    %541 = vmatprep.subr.mxu0 0.0
    %542 = vmatpush1.msra.mxu0 %v345
    %543 = vmatprep.subr.mxu0 0.0
    %544 = vmatpush1.msra.mxu0 %v346
    %545 = vmatprep.subr.mxu0 0.0
    %546 = vmatpush1.msra.mxu0 %v347
    %547 = vmatprep.subr.mxu0 0.0
    %548 = vmatpush1.msra.mxu0 %v348
    %549 = vmatprep.subr.mxu0 0.0
    %550 = vmatpush1.msra.mxu0 %v349
    %551 = vmatprep.subr.mxu0 0.0
    %552 = vmatpush1.msra.mxu0 %v350
    %553 = vmatprep.subr.mxu0 0.0
    %554 = vmatpush1.msra.mxu0 %v351
    %555 = vmatprep.subr.mxu0 0.0
    %556 = vmatpush1.msra.mxu0 %v352
    %557 = vmatprep.subr.mxu0 0.0
    %558 = vmatpush1.msra.mxu0 %v353
    %559 = vmatprep.subr.mxu0 0.0
    %560 = vmatpush1.msra.mxu0 %v354
    %561 = vmatprep.subr.mxu0 0.0
    %562 = vmatpush1.msra.mxu0 %v355
    %563 = vmatprep.mubr.f32.mxu0 %v279
    %564 = vmatmul.mubr.f32.gmra.mrb[0].mxu0 %v278
    %v565 = vpop.f32.mrb[0].mxu0
    %v566 = vadd.f32 %v491, %v565
    %v567 = vpop.f32.mrb[0].mxu0
    %568 = vmatprep.mubr.f32.mxu0 %v287
    %569 = vmatmul.mubr.f32.gmra.mrb[0].mxu0 %v286
    %v570 = vpop.f32.mrb[0].mxu0
    %v571 = vadd.f32 %v496, %v570
    %v572 = vpop.f32.mrb[0].mxu0
    %573 = vdwg.mxu0
    %574 = vmatprep.subr.mxu0 0.0
    %575 = vmatpush1.msra.mxu0 %v356
    %576 = vmatprep.subr.mxu0 0.0
    %577 = vmatpush1.msra.mxu0 %v357
    %578 = vmatprep.subr.mxu0 0.0
    %579 = vmatpush1.msra.mxu0 %v358
    %580 = vmatprep.subr.mxu0 0.0
    %581 = vmatpush1.msra.mxu0 %v359
    %582 = vmatprep.subr.mxu0 0.0
    %583 = vmatpush1.msra.mxu0 %v360
    %584 = vmatprep.subr.mxu0 0.0
    %585 = vmatpush1.msra.mxu0 %v361
    %586 = vmatprep.subr.mxu0 0.0
    %587 = vmatpush1.msra.mxu0 %v362
    %588 = vmatprep.subr.mxu0 0.0
    %589 = vmatpush1.msra.mxu0 %v363
    %590 = vmatprep.subr.mxu0 0.0
    %591 = vmatpush1.msra.mxu0 %v364
    %592 = vmatprep.subr.mxu0 0.0
    %593 = vmatpush1.msra.mxu0 %v365
    %594 = vmatprep.subr.mxu0 0.0
    %595 = vmatpush1.msra.mxu0 %v366
    %596 = vmatprep.subr.mxu0 0.0
    %597 = vmatpush1.msra.mxu0 %v367
    %598 = vmatprep.subr.mxu0 0.0
    %599 = vmatpush1.msra.mxu0 %v368
    %600 = vmatprep.subr.mxu0 0.0
    %601 = vmatpush1.msra.mxu0 %v369
    %602 = vmatprep.subr.mxu0 0.0
    %603 = vmatpush1.msra.mxu0 %v370
    %604 = vmatprep.subr.mxu0 0.0
    %605 = vmatpush1.msra.mxu0 %v371
    %606 = vmatprep.subr.mxu0 0.0
    %607 = vmatpush1.msra.mxu0 %v372
    %608 = vmatprep.subr.mxu0 0.0
    %609 = vmatpush1.msra.mxu0 %v373
    %610 = vmatprep.subr.mxu0 0.0
    %611 = vmatpush1.msra.mxu0 %v374
    %612 = vmatprep.subr.mxu0 0.0
    %613 = vmatpush1.msra.mxu0 %v375
    %614 = vmatprep.subr.mxu0 0.0
    %615 = vmatpush1.msra.mxu0 %v376
    %616 = vmatprep.subr.mxu0 0.0
    %617 = vmatpush1.msra.mxu0 %v377
    %618 = vmatprep.subr.mxu0 0.0
    %619 = vmatpush1.msra.mxu0 %v378
    %620 = vmatprep.subr.mxu0 0.0
    %621 = vmatpush1.msra.mxu0 %v379
    %622 = vmatprep.subr.mxu0 0.0
    %623 = vmatpush1.msra.mxu0 %v380
    %624 = vmatprep.subr.mxu0 0.0
    %625 = vmatpush1.msra.mxu0 %v381
    %626 = vmatprep.subr.mxu0 0.0
    %627 = vmatpush1.msra.mxu0 %v382
    %628 = vmatprep.subr.mxu0 0.0
    %629 = vmatpush1.msra.mxu0 %v383
    %630 = vmatprep.subr.mxu0 0.0
    %631 = vmatpush1.msra.mxu0 %v384
    %632 = vmatprep.subr.mxu0 0.0
    %633 = vmatpush1.msra.mxu0 %v385
    %634 = vmatprep.subr.mxu0 0.0
    %635 = vmatpush1.msra.mxu0 %v386
    %636 = vmatprep.subr.mxu0 0.0
    %637 = vmatpush1.msra.mxu0 %v387
    %638 = vmatprep.mubr.f32.mxu0 %v281
    %639 = vmatmul.mubr.f32.gmra.mrb[0].mxu0 %v280
    %v640 = vpop.f32.mrb[0].mxu0
    %v641 = vadd.f32 %v566, %v640
    %v642 = vpop.f32.mrb[0].mxu0
    %643 = vmatprep.mubr.f32.mxu0 %v289
    %644 = vmatmul.mubr.f32.gmra.mrb[0].mxu0 %v288
    %v645 = vpop.f32.mrb[0].mxu0
    %v646 = vadd.f32 %v571, %v645
    %v647 = vpop.f32.mrb[0].mxu0
    %648 = vdwg.mxu0
    %649 = vmatprep.subr.mxu0 0.0
    %650 = vmatpush1.msra.mxu0 %v388
    %651 = vmatprep.subr.mxu0 0.0
    %652 = vmatpush1.msra.mxu0 %v389
    %653 = vmatprep.subr.mxu0 0.0
    %654 = vmatpush1.msra.mxu0 %v390
    %655 = vmatprep.subr.mxu0 0.0
    %656 = vmatpush1.msra.mxu0 %v391
    %657 = vmatprep.subr.mxu0 0.0
    %658 = vmatpush1.msra.mxu0 %v392
    %659 = vmatprep.subr.mxu0 0.0
    %660 = vmatpush1.msra.mxu0 %v393
    %661 = vmatprep.subr.mxu0 0.0
    %662 = vmatpush1.msra.mxu0 %v394
    %663 = vmatprep.subr.mxu0 0.0
    %664 = vmatpush1.msra.mxu0 %v395
    %665 = vmatprep.subr.mxu0 0.0
    %666 = vmatpush1.msra.mxu0 %v396
    %667 = vmatprep.subr.mxu0 0.0
    %668 = vmatpush1.msra.mxu0 %v397
    %669 = vmatprep.subr.mxu0 0.0
    %670 = vmatpush1.msra.mxu0 %v398
    %671 = vmatprep.subr.mxu0 0.0
    %672 = vmatpush1.msra.mxu0 %v399
    %673 = vmatprep.subr.mxu0 0.0
    %674 = vmatpush1.msra.mxu0 %v400
    %675 = vmatprep.subr.mxu0 0.0
    %676 = vmatpush1.msra.mxu0 %v401
    %677 = vmatprep.subr.mxu0 0.0
    %678 = vmatpush1.msra.mxu0 %v402
    %679 = vmatprep.subr.mxu0 0.0
    %680 = vmatpush1.msra.mxu0 %v403
    %681 = vmatprep.subr.mxu0 0.0
    %682 = vmatpush1.msra.mxu0 %v404
    %683 = vmatprep.subr.mxu0 0.0
    %684 = vmatpush1.msra.mxu0 %v405
    %685 = vmatprep.subr.mxu0 0.0
    %686 = vmatpush1.msra.mxu0 %v406
    %687 = vmatprep.subr.mxu0 0.0
    %688 = vmatpush1.msra.mxu0 %v407
    %689 = vmatprep.subr.mxu0 0.0
    %690 = vmatpush1.msra.mxu0 %v408
    %691 = vmatprep.subr.mxu0 0.0
    %692 = vmatpush1.msra.mxu0 %v409
    %693 = vmatprep.subr.mxu0 0.0
    %694 = vmatpush1.msra.mxu0 %v410
    %695 = vmatprep.subr.mxu0 0.0
    %696 = vmatpush1.msra.mxu0 %v411
    %697 = vmatprep.subr.mxu0 0.0
    %698 = vmatpush1.msra.mxu0 %v412
    %699 = vmatprep.subr.mxu0 0.0
    %700 = vmatpush1.msra.mxu0 %v413
    %701 = vmatprep.subr.mxu0 0.0
    %702 = vmatpush1.msra.mxu0 %v414
    %703 = vmatprep.subr.mxu0 0.0
    %704 = vmatpush1.msra.mxu0 %v415
    %705 = vmatprep.subr.mxu0 0.0
    %706 = vmatpush1.msra.mxu0 %v416
    %707 = vmatprep.subr.mxu0 0.0
    %708 = vmatpush1.msra.mxu0 %v417
    %709 = vmatprep.subr.mxu0 0.0
    %710 = vmatpush1.msra.mxu0 %v418
    %711 = vmatprep.subr.mxu0 0.0
    %712 = vmatpush1.msra.mxu0 %v419
    %713 = vmatprep.mubr.f32.mxu0 %v283
    %714 = vmatmul.mubr.f32.gmra.mrb[0].mxu0 %v282
    %v715 = vpop.f32.mrb[0].mxu0
    %v716 = vadd.f32 %v641, %v715
    %v717 = vpop.f32.mrb[0].mxu0
    %718 = vmatprep.mubr.f32.mxu0 %v291
    %719 = vmatmul.mubr.f32.gmra.mrb[0].mxu0 %v290
    %v720 = vpop.f32.mrb[0].mxu0
    %v721 = vadd.f32 %v646, %v720
    %v722 = vpop.f32.mrb[0].mxu0
    %723 = vdwg.mxu0
    %v724 = vmax.f32 %v716, 0.0
    %v725 = vmax.f32 %v721, 0.0
    %v726 = vsub.f32 %v724, %v725
    %v727 = vstv %s37
    %v728 = vmul.f32 %v727, %v726
    %v729 = vadd.f32 %v725, %v728
    %vm730 = vcmask 261120
    %731 = vst.msk [vmem:[#allocation3] sm:$0xff] %vm730, %v729
    %732 = vst.msk [vmem:[#allocation3 + $0x8] sm:$0xff] %vm730, %v725
    %v733 = vld [vmem:[#allocation3] sm:$0xff]
    %v734 = vld [vmem:[#allocation3 + $0x8] sm:$0xff]
    %v735 = vld [vmem:[%s5] sm:$0xff]
    %v736 = vld [vmem:[%s5 + $0x8] sm:$0xff]
    %v737 = vld [vmem:[%s5 + $0x10] sm:$0xff]
    %v738 = vld [vmem:[%s5 + $0x18] sm:$0xff]
    %v739 = vlaneseq
    %v740 = vshrl.u32 %v739, 7
    %v741 = vsub.s32 0, %v740
    %v742 = vrot.slane %v274, %v741
    %v744 = vsel %vm730, %v733, 0
    %v747 = vsel %vm730, %v734, 0
    %749 = vmatprep.subr.mxu0 0.0
    %750 = vmatpush1.msra.mxu0 %v735
    %751 = vmatprep.subr.mxu0 0.0
    %752 = vmatpush1.msra.mxu0 %v736
    %753 = vmatprep.subr.mxu0 0.0
    %754 = vmatpush1.msra.mxu0 %v737
    %755 = vmatprep.subr.mxu0 0.0
    %756 = vmatpush1.msra.mxu0 %v738
    %757 = vmatprep.subr.mxu0 0.0
    %758 = vmatpush1.msra.mxu0 0.0
    %759 = vmatprep.subr.mxu0 0.0
    %760 = vmatpush1.msra.mxu0 0.0
    %761 = vmatprep.subr.mxu0 0.0
    %762 = vmatpush1.msra.mxu0 0.0
    %763 = vmatprep.subr.mxu0 0.0
    %764 = vmatpush1.msra.mxu0 0.0
    %765 = vmatprep.subr.mxu0 0.0
    %766 = vmatpush1.msra.mxu0 0.0
    %767 = vmatprep.subr.mxu0 0.0
    %768 = vmatpush1.msra.mxu0 0.0
    %769 = vmatprep.subr.mxu0 0.0
    %770 = vmatpush1.msra.mxu0 0.0
    %771 = vmatprep.subr.mxu0 0.0
    %772 = vmatpush1.msra.mxu0 0.0
    %773 = vmatprep.subr.mxu0 0.0
    %774 = vmatpush1.msra.mxu0 0.0
    %775 = vmatprep.subr.mxu0 0.0
    %776 = vmatpush1.msra.mxu0 0.0
    %777 = vmatprep.subr.mxu0 0.0
    %778 = vmatpush1.msra.mxu0 0.0
    %779 = vmatprep.subr.mxu0 0.0
    %780 = vmatpush1.msra.mxu0 0.0
    %781 = vmatprep.subr.mxu0 0.0
    %782 = vmatpush1.msra.mxu0 0.0
    %783 = vmatprep.subr.mxu0 0.0
    %784 = vmatpush1.msra.mxu0 0.0
    %785 = vmatprep.subr.mxu0 0.0
    %786 = vmatpush1.msra.mxu0 0.0
    %787 = vmatprep.subr.mxu0 0.0
    %788 = vmatpush1.msra.mxu0 0.0
    %789 = vmatprep.subr.mxu0 0.0
    %790 = vmatpush1.msra.mxu0 0.0
    %791 = vmatprep.subr.mxu0 0.0
    %792 = vmatpush1.msra.mxu0 0.0
    %793 = vmatprep.subr.mxu0 0.0
    %794 = vmatpush1.msra.mxu0 0.0
    %795 = vmatprep.subr.mxu0 0.0
    %796 = vmatpush1.msra.mxu0 0.0
    %797 = vmatprep.subr.mxu0 0.0
    %798 = vmatpush1.msra.mxu0 0.0
    %799 = vmatprep.subr.mxu0 0.0
    %800 = vmatpush1.msra.mxu0 0.0
    %801 = vmatprep.subr.mxu0 0.0
    %802 = vmatpush1.msra.mxu0 0.0
    %803 = vmatprep.subr.mxu0 0.0
    %804 = vmatpush1.msra.mxu0 0.0
    %805 = vmatprep.subr.mxu0 0.0
    %806 = vmatpush1.msra.mxu0 0.0
    %807 = vmatprep.subr.mxu0 0.0
    %808 = vmatpush1.msra.mxu0 0.0
    %809 = vmatprep.subr.mxu0 0.0
    %810 = vmatpush1.msra.mxu0 0.0
    %811 = vmatprep.subr.mxu0 0.0
    %812 = vmatpush1.msra.mxu0 0.0
    %813 = vmatprep.mubr.f32.mxu0 0.0
    %814 = vmatmul.mubr.f32.gmra.mrb[0].mxu0 %v744
    %v815 = vpop.f32.mrb[0].mxu0
    %v816 = vadd.f32 %v742, %v815
    %v817 = vpop.f32.mrb[0].mxu0
    %818 = vmatprep.mubr.f32.mxu0 0.0
    %819 = vmatmul.mubr.f32.gmra.mrb[0].mxu0 %v747
    %v820 = vpop.f32.mrb[0].mxu0
    %v821 = vadd.f32 %v742, %v820
    %v822 = vpop.f32.mrb[0].mxu0
    %823 = vdwg.mxu0
    %v824 = vmax.f32 %v816, 0.0
    %v825 = vmax.f32 %v821, 0.0
    %v826 = vsub.f32 %v824, %v825
    %v827 = vstv %s39
    %v828 = vmul.f32 %v827, %v826
    %v829 = vadd.f32 %v825, %v828
    %v830 = vld [vmem:[%s6] sm:$0xff]
    %v831 = vld [vmem:[%s6 + $0x8] sm:$0xff]
    %v832 = vld [vmem:[%s6 + $0x10] sm:$0xff]
    %v833 = vld [vmem:[%s6 + $0x18] sm:$0xff]
    %v834 = vlaneseq
    %v835 = vshrl.u32 %v834, 7
    %v836 = vsub.s32 0, %v835
    %v837 = vrot.slane %v275, %v836
    %v839 = vsel %vm730, %v829, 0
    %841 = vmatprep.subr.mxu0 0.0
    %842 = vmatpush1.msra.mxu0 %v830
    %843 = vmatprep.subr.mxu0 0.0
    %844 = vmatpush1.msra.mxu0 %v831
    %845 = vmatprep.subr.mxu0 0.0
    %846 = vmatpush1.msra.mxu0 %v832
    %847 = vmatprep.subr.mxu0 0.0
    %848 = vmatpush1.msra.mxu0 %v833
    %849 = vmatprep.subr.mxu0 0.0
    %850 = vmatpush1.msra.mxu0 0.0
    %851 = vmatprep.subr.mxu0 0.0
    %852 = vmatpush1.msra.mxu0 0.0
    %853 = vmatprep.subr.mxu0 0.0
    %854 = vmatpush1.msra.mxu0 0.0
    %855 = vmatprep.subr.mxu0 0.0
    %856 = vmatpush1.msra.mxu0 0.0
    %857 = vmatprep.subr.mxu0 0.0
    %858 = vmatpush1.msra.mxu0 0.0
    %859 = vmatprep.subr.mxu0 0.0
    %860 = vmatpush1.msra.mxu0 0.0
    %861 = vmatprep.subr.mxu0 0.0
    %862 = vmatpush1.msra.mxu0 0.0
    %863 = vmatprep.subr.mxu0 0.0
    %864 = vmatpush1.msra.mxu0 0.0
    %865 = vmatprep.subr.mxu0 0.0
    %866 = vmatpush1.msra.mxu0 0.0
    %867 = vmatprep.subr.mxu0 0.0
    %868 = vmatpush1.msra.mxu0 0.0
    %869 = vmatprep.subr.mxu0 0.0
    %870 = vmatpush1.msra.mxu0 0.0
    %871 = vmatprep.subr.mxu0 0.0
    %872 = vmatpush1.msra.mxu0 0.0
    %873 = vmatprep.subr.mxu0 0.0
    %874 = vmatpush1.msra.mxu0 0.0
    %875 = vmatprep.subr.mxu0 0.0
    %876 = vmatpush1.msra.mxu0 0.0
    %877 = vmatprep.subr.mxu0 0.0
    %878 = vmatpush1.msra.mxu0 0.0
    %879 = vmatprep.subr.mxu0 0.0
    %880 = vmatpush1.msra.mxu0 0.0
    %881 = vmatprep.subr.mxu0 0.0
    %882 = vmatpush1.msra.mxu0 0.0
    %883 = vmatprep.subr.mxu0 0.0
    %884 = vmatpush1.msra.mxu0 0.0
    %885 = vmatprep.subr.mxu0 0.0
    %886 = vmatpush1.msra.mxu0 0.0
    %887 = vmatprep.subr.mxu0 0.0
    %888 = vmatpush1.msra.mxu0 0.0
    %889 = vmatprep.subr.mxu0 0.0
    %890 = vmatpush1.msra.mxu0 0.0
    %891 = vmatprep.subr.mxu0 0.0
    %892 = vmatpush1.msra.mxu0 0.0
    %893 = vmatprep.subr.mxu0 0.0
    %894 = vmatpush1.msra.mxu0 0.0
    %895 = vmatprep.subr.mxu0 0.0
    %896 = vmatpush1.msra.mxu0 0.0
    %897 = vmatprep.subr.mxu0 0.0
    %898 = vmatpush1.msra.mxu0 0.0
    %899 = vmatprep.subr.mxu0 0.0
    %900 = vmatpush1.msra.mxu0 0.0
    %901 = vmatprep.subr.mxu0 0.0
    %902 = vmatpush1.msra.mxu0 0.0
    %903 = vmatprep.subr.mxu0 0.0
    %904 = vmatpush1.msra.mxu0 0.0
    %905 = vmatprep.mubr.f32.mxu0 0.0
    %906 = vmatmul.mubr.f32.gmra.mrb[0].mxu0 %v839
    %v907 = vpop.f32.mrb[0].mxu0
    %v908 = vadd.f32 %v837, %v907
    %v909 = vpop.f32.mrb[0].mxu0
    %910 = vdwg.mxu0
    %911 = vst [vmem:[#allocation6] sm:$0xff] %v908
    // Predicated region
    $region34: #{_device_forward.1} parent=1 // pred_check
      _
    $region35: #{_device_forward.1} parent=1 // pred_check_branch
      %913 = sbr.rel (0) target = $region37
    $region36: #{_device_forward.1} parent=1 // pred_region
      %s915 = ssub.s32 128, 32
      %916 = vsyncadd [#allocation7], %s915
      %s917 = sshll.u32 [#allocation6], 4
      %s918 = int_to_ptr.vmem [resolvable:$true] %s917
      %923 = dma.vmem_to_hbm [thread:$0]  %s918, 32, %s8, [#allocation7], 32, 32, 2
    $region37: #{_device_forward.1} parent=1 // pred_fallthru
      _
    // Predicated region
    $region38: #{_device_forward.1} parent=1 // pred_check
      _
    $region39: #{_device_forward.1} parent=1 // pred_check_branch
      %925 = sbr.rel (0) target = $region41
    $region40: #{_device_forward.1} parent=1 // pred_region
      %926 = dma.done [#allocation7], 128
    $region41: #{_device_forward.1} parent=1 // pred_fallthru
      _
    %927 = vsyncpa [#allocation7], 1

</llo_original>
